<compile_context>
chip_gen: v6e
topology: v6e:2x2x1
jax: 0.10.0
libtpu: 0.0.40
codegen_flags: <defaults>
</compile_context>

<pallas_src>
import functools
import math

import jax
import jax.numpy as jnp
from jax.experimental import pallas as pl
from jax.experimental.pallas import tpu as pltpu

EPS = 1e-5                       # nn.LayerNorm default
_VMEM_LIMIT = 64 * 1024 * 1024   # explicit scoped-VMEM budget (fits v7x)


def _pick_tile(total, desired):
    """Largest 'nice' tile: `desired` if it divides `total`, else the full dim."""
    if total <= desired:
        return total
    return desired if total % desired == 0 else total


def _layernorm_f32(x, w, b):
    x = x.astype(jnp.float32)
    mu = jnp.mean(x, axis=-1, keepdims=True)
    var = jnp.mean(jnp.square(x - mu), axis=-1, keepdims=True)
    return (x - mu) * jax.lax.rsqrt(var + EPS) * w + b


# ----------------------------- embedding layernorm ---------------------------
def layernorm_kernel(x_ref, w_ref, b_ref, o_ref):
    o_ref[...] = _layernorm_f32(x_ref[...], w_ref[...], b_ref[...])


def layernorm_rows(x, w, b):
    R, D = x.shape
    TR = _pick_tile(R, 256)
    return pl.pallas_call(
        layernorm_kernel,
        out_shape=jax.ShapeDtypeStruct((R, D), jnp.float32),
        grid=(R // TR,),
        in_specs=[
            pl.BlockSpec((TR, D), lambda i: (i, 0)),
            pl.BlockSpec((1, D), lambda i: (0, 0)),
            pl.BlockSpec((1, D), lambda i: (0, 0)),
        ],
        out_specs=pl.BlockSpec((TR, D), lambda i: (i, 0)),
        compiler_params=pltpu.CompilerParams(
            dimension_semantics=("parallel",),
            vmem_limit_bytes=_VMEM_LIMIT),
    )(x, w, b)


# ------------------------------ attention half -------------------------------
def attn_block_kernel(n_heads, hq_ref, hall_ref, n1w_ref, n1b_ref,
                      qkvw_ref, qkvb_ref, o_ref):
    xq = hq_ref[0]                      # (TQ, D) f32 (residual input, query rows)
    xall = hall_ref[0]                  # (S, D)  f32 (all rows, for K/V)
    TQ, D = xq.shape
    S = xall.shape[0]
    H = n_heads
    Dh = D // H
    scale = 1.0 / math.sqrt(Dh)

    w = qkvw_ref[...]                   # (D, 3D) bf16, [Q | K | V] blocked
    bias = qkvb_ref[...]                # (1, 3D) f32

    n1w = n1w_ref[...]
    n1b = n1b_ref[...]
    xq_n = _layernorm_f32(xq, n1w, n1b).astype(jnp.bfloat16)
    xall_n = _layernorm_f32(xall, n1w, n1b).astype(jnp.bfloat16)

    q = jnp.dot(xq_n, w[:, :D], preferred_element_type=jnp.float32) + bias[:, :D]
    k = jnp.dot(xall_n, w[:, D:2 * D], preferred_element_type=jnp.float32) + bias[:, D:2 * D]
    v = jnp.dot(xall_n, w[:, 2 * D:], preferred_element_type=jnp.float32) + bias[:, 2 * D:]

    q = q.reshape(TQ, H, Dh).astype(jnp.bfloat16)
    k = k.reshape(S, H, Dh).astype(jnp.bfloat16)
    v = v.reshape(S, H, Dh).astype(jnp.bfloat16)

    # scores batched over heads, contraction over Dh (no explicit k.T transpose)
    s = jnp.einsum('qhd,khd->hqk', q, k,
                   preferred_element_type=jnp.float32) * scale    # (H, TQ, S)

    # in-kernel causal mask (replaces the DMA'd (S,S) -inf triu mask)
    q0 = pl.program_id(1) * TQ
    row = q0 + jax.lax.broadcasted_iota(jnp.int32, (1, TQ, S), 1)
    col = jax.lax.broadcasted_iota(jnp.int32, (1, TQ, S), 2)
    s = jnp.where(col <= row, s, -jnp.inf)

    m = jnp.max(s, axis=-1, keepdims=True)
    e = jnp.exp(s - m)
    denom = jnp.sum(e, axis=-1, keepdims=True)
    p = (e * pl.reciprocal(denom, approx=True)).astype(jnp.bfloat16)
    # TODO(synk): attention dropout_p=0.1 is identity in eval mode.

    ctx = jnp.einsum('hqk,khd->qhd', p, v,
                     preferred_element_type=jnp.float32)          # (TQ, H, Dh)
    ctx = ctx.reshape(TQ, D)

    o_ref[0] = xq + ctx


def attention_block(h, p, n_heads):
    B, S, D = h.shape
    TQ = _pick_tile(S, 512)
    return pl.pallas_call(
        functools.partial(attn_block_kernel, n_heads),
        out_shape=jax.ShapeDtypeStruct((B, S, D), jnp.float32),
        grid=(B, S // TQ),
        in_specs=[
            pl.BlockSpec((1, TQ, D), lambda b, q: (b, q, 0)),   # query rows
            pl.BlockSpec((1, S, D), lambda b, q: (b, 0, 0)),    # all rows (K/V)
            pl.BlockSpec((1, D), lambda b, q: (0, 0)),          # norm1 w
            pl.BlockSpec((1, D), lambda b, q: (0, 0)),          # norm1 b
            pl.BlockSpec((D, 3 * D), lambda b, q: (0, 0)),      # qkv w (bf16)
            pl.BlockSpec((1, 3 * D), lambda b, q: (0, 0)),      # qkv b
        ],
        out_specs=pl.BlockSpec((1, TQ, D), lambda b, q: (b, q, 0)),
        compiler_params=pltpu.CompilerParams(
            dimension_semantics=("parallel", "parallel"),
            vmem_limit_bytes=_VMEM_LIMIT),
    )(h, h, p["norm1_w"], p["norm1_b"], p["qkv_w"], p["qkv_b"])


# --------------------------------- MLP half ----------------------------------
def mlp_block_kernel(x_ref, n2w_ref, n2b_ref, f1w_ref, f1b_ref, f2w_ref, f2b_ref,
                     o_ref, xn_ref, acc_ref):
    j = pl.program_id(1)

    @pl.when(j == 0)
    def _():
        xn_ref[...] = _layernorm_f32(x_ref[...], n2w_ref[...],
                                     n2b_ref[...]).astype(jnp.bfloat16)
        acc_ref[...] = jnp.zeros_like(acc_ref)

    hmid = jnp.dot(xn_ref[...], f1w_ref[...],
                   preferred_element_type=jnp.float32) + f1b_ref[...]
    hmid = jax.nn.gelu(hmid, approximate=False).astype(jnp.bfloat16)  # exact erf gelu
    acc_ref[...] += jnp.dot(hmid, f2w_ref[...], preferred_element_type=jnp.float32)

    @pl.when(j == pl.num_programs(1) - 1)
    def _():
        # TODO(synk): MLP Dropout(0.2) layers are identity in eval mode.
        o_ref[...] = x_ref[...] + acc_ref[...] + f2b_ref[...]


def mlp_block(x_rows, p):
    R, D = x_rows.shape
    D4 = 4 * D
    TR = _pick_tile(R, 256)
    TH = _pick_tile(D4, 512)
    return pl.pallas_call(
        mlp_block_kernel,
        out_shape=jax.ShapeDtypeStruct((R, D), jnp.float32),
        grid=(R // TR, D4 // TH),
        in_specs=[
            pl.BlockSpec((TR, D), lambda i, j: (i, 0)),     # residual rows
            pl.BlockSpec((1, D), lambda i, j: (0, 0)),      # norm2 w
            pl.BlockSpec((1, D), lambda i, j: (0, 0)),      # norm2 b
            pl.BlockSpec((D, TH), lambda i, j: (0, j)),     # fc1 w chunk (bf16)
            pl.BlockSpec((1, TH), lambda i, j: (0, j)),     # fc1 b chunk
            pl.BlockSpec((TH, D), lambda i, j: (j, 0)),     # fc2 w chunk (bf16)
            pl.BlockSpec((1, D), lambda i, j: (0, 0)),      # fc2 b
        ],
        out_specs=pl.BlockSpec((TR, D), lambda i, j: (i, 0)),
        scratch_shapes=[
            pltpu.VMEM((TR, D), jnp.bfloat16),   # normed rows (computed once per row tile)
            pltpu.VMEM((TR, D), jnp.float32),    # fc2 accumulator
        ],
        compiler_params=pltpu.CompilerParams(
            dimension_semantics=("parallel", "arbitrary"),
            vmem_limit_bytes=_VMEM_LIMIT),
    )(x_rows, p["norm2_w"], p["norm2_b"],
      p["fc1_w"], p["fc1_b"], p["fc2_w"], p["fc2_b"])


# ------------------------------- output head ---------------------------------
def logits_kernel(x_ref, w_ref, b_ref, o_ref):
    x = x_ref[...].astype(jnp.bfloat16)
    # contract D (last dim of both) -> no host-side tok_emb.T materialization
    out = jax.lax.dot_general(
        x, w_ref[...],
        dimension_numbers=(((1,), (1,)), ((), ())),
        preferred_element_type=jnp.float32)
    o_ref[...] = out + b_ref[...]


def output_head(x_rows, tok_emb, fc_b):
    R, D = x_rows.shape
    V = tok_emb.shape[0]
    TR = _pick_tile(R, 256)
    TV = _pick_tile(V, 2048)
    return pl.pallas_call(
        logits_kernel,
        out_shape=jax.ShapeDtypeStruct((R, V), jnp.float32),
        grid=(R // TR, V // TV),
        in_specs=[
            pl.BlockSpec((TR, D), lambda i, v: (i, 0)),
            pl.BlockSpec((TV, D), lambda i, v: (v, 0)),   # tied weight tile (bf16)
            pl.BlockSpec((1, TV), lambda i, v: (0, v)),
        ],
        out_specs=pl.BlockSpec((TR, TV), lambda i, v: (i, v)),
        compiler_params=pltpu.CompilerParams(
            dimension_semantics=("parallel", "parallel"),
            vmem_limit_bytes=_VMEM_LIMIT),
    )(x_rows, tok_emb, fc_b)


# ------------------------------ full forward ---------------------------------
def transformer_forward(tokens, params, n_heads):
    B, S = tokens.shape
    tok_emb = params["tok_emb"]          # (V, D) bf16
    pos_emb = params["pos_emb"]          # (max_seq_len, D) bf16
    D = tok_emb.shape[1]

    # embedding lookups (glue, plain JAX); residual stream kept in f32
    h = (jnp.take(tok_emb, tokens, axis=0).astype(jnp.float32)
         + pos_emb[:S].astype(jnp.float32)[None, :, :])
    h = layernorm_rows(h.reshape(B * S, D), params["norm_w"], params["norm_b"])
    h = h.reshape(B, S, D)

    for blk in params["blocks"]:
        h = attention_block(h, blk, n_heads)                         # x + attn(norm1(x))
        h = mlp_block(h.reshape(B * S, D), blk).reshape(B, S, D)     # x + mlp(norm2(x))

    # tied output projection: logits = h @ tok_emb.T + fc_b (transpose done in-kernel)
    logits = output_head(h.reshape(B * S, D), tok_emb, params["fc_b"])
    return logits.reshape(B, S, -1)


# ---------------------------- parameter creation -----------------------------
def init_params(key, *, n_dim, n_blocks, n_heads, max_seq_len, vocab_size):
    del n_heads
    keys = jax.random.split(key, 3 + 4 * n_blocks)
    kiter = iter(keys)

    def nrm_bf16(shape, scale=0.02):
        return (scale * jax.random.normal(next(kiter), shape)).astype(jnp.bfloat16)

    D, D4 = n_dim, 4 * n_dim
    params = {
        "tok_emb": nrm_bf16((vocab_size, D)),
        "pos_emb": nrm_bf16((max_seq_len, D)),
        "norm_w": jnp.ones((1, D), jnp.float32),
        "norm_b": jnp.zeros((1, D), jnp.float32),
        "fc_b": jnp.zeros((1, vocab_size), jnp.float32),
        "blocks": [],
    }
    for _ in range(n_blocks):
        params["blocks"].append({
            "norm1_w": jnp.ones((1, D), jnp.float32),
            "norm1_b": jnp.zeros((1, D), jnp.float32),
            # blocked [Q | K | V] column layout, heads contiguous inside each block
            "qkv_w": nrm_bf16((D, 3 * D)),
            "qkv_b": jnp.zeros((1, 3 * D), jnp.float32),
            "norm2_w": jnp.ones((1, D), jnp.float32),
            "norm2_b": jnp.zeros((1, D), jnp.float32),
            "fc1_w": nrm_bf16((D, D4)),
            "fc1_b": jnp.zeros((1, D4), jnp.float32),
            "fc2_w": nrm_bf16((D4, D)),
            "fc2_b": jnp.zeros((1, D), jnp.float32),
        })
    return params


if __name__ == "__main__":
    # Small ModelArgs-consistent config
    n_dim, n_blocks, n_heads = 32, 2, 4
    max_seq_len, vocab_size = 16, 64
    B, S = 2, 8

    key = jax.random.PRNGKey(0)
    pkey, tkey = jax.random.split(key)
    params = init_params(pkey, n_dim=n_dim, n_blocks=n_blocks, n_heads=n_heads,
                         max_seq_len=max_seq_len, vocab_size=vocab_size)

    tokens = jax.random.randint(tkey, (B, S), 0, vocab_size, dtype=jnp.int32)

    logits = transformer_forward(tokens, params, n_heads)
    logits = jax.block_until_ready(logits)

    assert logits.shape == (B, S, vocab_size), logits.shape
    assert logits.dtype == jnp.float32
    assert bool(jnp.all(jnp.isfinite(logits)))
    print("KERNEL_OK")
</pallas_src>

<mosaic_0001>
module attributes {stable_mosaic.version = 11 : i64} {
  func.func @layernorm_kernel(%arg0: i32, %arg1: memref<16x32xf32, #tpu.memory_space<vmem>>, %arg2: memref<1x32xf32, #tpu.memory_space<vmem>>, %arg3: memref<1x32xf32, #tpu.memory_space<vmem>>, %arg4: memref<16x32xf32, #tpu.memory_space<vmem>>) attributes {dimension_semantics = [#tpu.dimension_semantics<parallel>], iteration_bounds = array<i64: 1>, scalar_prefetch = 0 : i64, scratch_operands = 0 : i64, tpu.core_type = #tpu.core_type<tc>, window_params = [{transform_indices = @transform_0, window_bounds = array<i64: 16, 32>}, {pipeline_mode = #tpu.pipeline_mode<synchronous>, transform_indices = @transform_1, window_bounds = array<i64: 1, 32>}, {pipeline_mode = #tpu.pipeline_mode<synchronous>, transform_indices = @transform_2, window_bounds = array<i64: 1, 32>}, {transform_indices = @transform_3, window_bounds = array<i64: 16, 32>}]} {
    %c0 = arith.constant 0 : index
    %c0_0 = arith.constant 0 : index
    %0 = vector.load %arg1[%c0, %c0_0] : memref<16x32xf32, #tpu.memory_space<vmem>>, vector<16x32xf32>
    %c0_1 = arith.constant 0 : index
    %c0_2 = arith.constant 0 : index
    %1 = vector.load %arg2[%c0_1, %c0_2] : memref<1x32xf32, #tpu.memory_space<vmem>>, vector<1x32xf32>
    %c0_3 = arith.constant 0 : index
    %c0_4 = arith.constant 0 : index
    %2 = vector.load %arg3[%c0_3, %c0_4] : memref<1x32xf32, #tpu.memory_space<vmem>>, vector<1x32xf32>
    %cst = arith.constant dense<0.000000e+00> : vector<16xf32>
    %3 = vector.multi_reduction <add>, %0, %cst [1] : vector<16x32xf32> to vector<16xf32>
    %4 = vector.shape_cast %3 : vector<16xf32> to vector<16x1xf32>
    %cst_5 = arith.constant 3.200000e+01 : f32
    %5 = vector.broadcast %cst_5 : f32 to vector<16x1xf32>
    %6 = arith.divf %4, %5 : vector<16x1xf32>
    %7 = vector.broadcast %6 : vector<16x1xf32> to vector<16x32xf32>
    %8 = arith.subf %0, %7 : vector<16x32xf32>
    %9 = arith.mulf %8, %8 : vector<16x32xf32>
    %cst_6 = arith.constant dense<0.000000e+00> : vector<16xf32>
    %10 = vector.multi_reduction <add>, %9, %cst_6 [1] : vector<16x32xf32> to vector<16xf32>
    %11 = vector.shape_cast %10 : vector<16xf32> to vector<16x1xf32>
    %cst_7 = arith.constant 3.200000e+01 : f32
    %12 = vector.broadcast %cst_7 : f32 to vector<16x1xf32>
    %13 = arith.divf %11, %12 : vector<16x1xf32>
    %14 = vector.broadcast %6 : vector<16x1xf32> to vector<16x32xf32>
    %15 = arith.subf %0, %14 : vector<16x32xf32>
    %cst_8 = arith.constant 9.99999974E-6 : f32
    %16 = vector.broadcast %cst_8 : f32 to vector<16x1xf32>
    %17 = arith.addf %13, %16 : vector<16x1xf32>
    %18 = math.rsqrt %17 : vector<16x1xf32>
    %19 = vector.broadcast %18 : vector<16x1xf32> to vector<16x32xf32>
    %20 = arith.mulf %15, %19 : vector<16x32xf32>
    %21 = vector.broadcast %1 : vector<1x32xf32> to vector<16x32xf32>
    %22 = arith.mulf %20, %21 : vector<16x32xf32>
    %23 = vector.broadcast %2 : vector<1x32xf32> to vector<16x32xf32>
    %24 = arith.addf %22, %23 : vector<16x32xf32>
    %c0_9 = arith.constant 0 : index
    %c0_10 = arith.constant 0 : index
    %25 = vector.load %arg4[%c0_9, %c0_10] : memref<16x32xf32, #tpu.memory_space<vmem>>, vector<16x32xf32>
    tpu.vector_store %arg4[%c0_9, %c0_10], %24 {strides = array<i32>} : memref<16x32xf32, #tpu.memory_space<vmem>>, vector<16x32xf32>,
    return
  }
  func.func @transform_0(%arg0: i32) -> (i32, i32) {
    %c0_i32 = arith.constant 0 : i32
    %c0_i32_0 = arith.constant 0 : i32
    return %arg0, %c0_i32 : i32, i32
  }
  func.func @transform_1(%arg0: i32) -> (i32, i32) {
    %c0_i32 = arith.constant 0 : i32
    %c0_i32_0 = arith.constant 0 : i32
    %c0_i32_1 = arith.constant 0 : i32
    return %c0_i32, %c0_i32_0 : i32, i32
  }
  func.func @transform_2(%arg0: i32) -> (i32, i32) {
    %c0_i32 = arith.constant 0 : i32
    %c0_i32_0 = arith.constant 0 : i32
    %c0_i32_1 = arith.constant 0 : i32
    return %c0_i32, %c0_i32_0 : i32, i32
  }
  func.func @transform_3(%arg0: i32) -> (i32, i32) {
    %c0_i32 = arith.constant 0 : i32
    %c0_i32_0 = arith.constant 0 : i32
    return %arg0, %c0_i32 : i32, i32
  }
}

</mosaic_0001>

<llo_original>
// kernel: tpu_custom_call.1
$region0: #{tpu_custom_call.1}
  #allocation0 [shape = 'u32[]', space=smem, size = 0x4, offset = 0x4, fixed_abs, tag = 'smem constant byte address 0x4 - core index']
  #allocation1 [shape = 'u32[144,128]{1,0:T(1,128)}', space=vmem, size = 0x12000, scoped, tag = 'internal scratch']
  %s0 = inlined_call_operand.hbm [shape: f32[16,32], index: 0, kind: input, shape index: {}]
  %s1 = inlined_call_operand.vmem [shape: f32[1,32], index: 1, kind: input, shape index: {}]
  %s2 = inlined_call_operand.vmem [shape: f32[1,32], index: 2, kind: input, shape index: {}]
  %s3 = inlined_call_operand.hbm [shape: f32[16,32], index: 3, kind: output, shape index: {}]
  %s4 = sld [smem:[#allocation0]]
  $region26: #{tpu_custom_call.1} parent=0
    _
  %s6 = ssub.s32 1, %s4
  %s7 = scalar_select 0, %s6, %s4
  $region1: #{tpu_custom_call.1} parent=0
    #allocation2 [shape = 'u8[8192]{0}', space=vmem, size = 0x2000, scoped, tag = 'input window, operand 0, single buffered']
    #allocation3 [shape = 's32[1]{0}', space=sflag, size = 0x4, scoped, tag = 'scoped memory for tpu_custom_call.1']
    #allocation4 [shape = 's32[1]{0}', space=sflag, size = 0x4, scoped, tag = 'scoped memory for tpu_custom_call.1']
    #allocation5 [shape = 'u8[8192]{0}', space=vmem, size = 0x2000, scoped, tag = 'output window, operand 0, single buffered']
    %8 = vsyncpa [#allocation3], 0
    %9 = vsyncpa [#allocation4], 0
    // Predicated region
    $region2: #{tpu_custom_call.1} parent=1 // pred_check
      _
    $region3: #{tpu_custom_call.1} parent=1 // pred_check_branch
      %11 = sbr.rel (0) target = $region5
    $region4: #{tpu_custom_call.1} parent=1 // pred_region
      %s13 = ssub.s32 256, 256
      %14 = vsyncadd [#allocation3], %s13
      %s15 = sshll.u32 [#allocation2], 4
      %s16 = int_to_ptr.vmem [resolvable:$true] %s15
      %21 = dma.hbm_to_vmem [thread:$0]  %s0, 256, %s16, [#allocation3], 128, 128, 8
    $region5: #{tpu_custom_call.1} parent=1 // pred_fallthru
      _
    // Predicated region
    $region6: #{tpu_custom_call.1} parent=1 // pred_check
      _
    $region7: #{tpu_custom_call.1} parent=1 // pred_check_branch
      %23 = sbr.rel (0) target = $region9
    $region8: #{tpu_custom_call.1} parent=1 // pred_region
      _
    $region9: #{tpu_custom_call.1} parent=1 // pred_fallthru
      _
    // Predicated region
    $region10: #{tpu_custom_call.1} parent=1 // pred_check
      _
    $region11: #{tpu_custom_call.1} parent=1 // pred_check_branch
      %25 = sbr.rel (0) target = $region13
    $region12: #{tpu_custom_call.1} parent=1 // pred_region
      _
    $region13: #{tpu_custom_call.1} parent=1 // pred_fallthru
      _
    // Predicated region
    $region14: #{tpu_custom_call.1} parent=1 // pred_check
      _
    $region15: #{tpu_custom_call.1} parent=1 // pred_check_branch
      %27 = sbr.rel (0) target = $region17
    $region16: #{tpu_custom_call.1} parent=1 // pred_region
      %28 = dma.done [#allocation3], 256
    $region17: #{tpu_custom_call.1} parent=1 // pred_fallthru
      _
    %v29 = vld [vmem:[#allocation2] sm:$0xff]
    %v30 = vld [vmem:[#allocation2 + $0x8] sm:$0xff]
    %v31 = vld [vmem:[%s1] sm:$0x1]
    %v32 = vld [vmem:[%s2] sm:$0x1]
    %vm33 = vcmask 261120
    %v34 = vsel %vm33, %v29, 0.0
    %35 = vadd.xlane.f32.xlu0 %v34
    %v36 = vpop.xlane.xlu0 %35
    %v37 = vsel %vm33, %v30, 0.0
    %38 = vadd.xlane.f32.xlu0 %v37
    %v39 = vpop.xlane.xlu0 %38
    %v40 = vrcp.pop 32.0
    %v41 = vmul.f32 %v36, %v40
    %v42 = vmul.f32 %v39, %v40
    %v43 = vsub.f32 %v29, %v41
    %v44 = vsub.f32 %v30, %v42
    %v45 = vmul.f32 %v43, %v43
    %v46 = vmul.f32 %v44, %v44
    %v47 = vsel %vm33, %v45, 0.0
    %48 = vadd.xlane.f32.xlu0 %v47
    %v49 = vpop.xlane.xlu0 %48
    %v50 = vsel %vm33, %v46, 0.0
    %51 = vadd.xlane.f32.xlu0 %v50
    %v52 = vpop.xlane.xlu0 %51
    %v53 = vmul.f32 %v49, %v40
    %v54 = vmul.f32 %v52, %v40
    %v55 = vadd.f32 %v53, 1e-05
    %v56 = vadd.f32 %v54, 1e-05
    %v57 = vrsqrt.pop %v55
    %v58 = vrsqrt.pop %v56
    %v59 = vmul.f32 %v43, %v57
    %v60 = vmul.f32 %v44, %v58
    %v62 = vlaneseq
    %v63 = vshrl.u32 %v62, 7
    %v64 = vsub.s32 0, %v63
    %v65 = vrot.slane %v31, %v64
    %v67 = vmul.f32 %v59, %v65
    %v68 = vmul.f32 %v60, %v65
    %v70 = vlaneseq
    %v71 = vshrl.u32 %v70, 7
    %v72 = vsub.s32 0, %v71
    %v73 = vrot.slane %v32, %v72
    %v75 = vadd.f32 %v67, %v73
    %v76 = vadd.f32 %v68, %v73
    %77 = vst.msk [vmem:[#allocation5] sm:$0xff] %vm33, %v75
    %78 = vst.msk [vmem:[#allocation5 + $0x8] sm:$0xff] %vm33, %v76
    // Predicated region
    $region18: #{tpu_custom_call.1} parent=1 // pred_check
      _
    $region19: #{tpu_custom_call.1} parent=1 // pred_check_branch
      %80 = sbr.rel (0) target = $region21
    $region20: #{tpu_custom_call.1} parent=1 // pred_region
      %s82 = ssub.s32 256, 256
      %83 = vsyncadd [#allocation4], %s82
      %s84 = sshll.u32 [#allocation5], 4
      %s85 = int_to_ptr.vmem [resolvable:$true] %s84
      %90 = dma.vmem_to_hbm [thread:$0]  %s85, 256, %s3, [#allocation4], 128, 128, 8
    $region21: #{tpu_custom_call.1} parent=1 // pred_fallthru
      _
    // Predicated region
    $region22: #{tpu_custom_call.1} parent=1 // pred_check
      _
    $region23: #{tpu_custom_call.1} parent=1 // pred_check_branch
      %92 = sbr.rel (0) target = $region25
    $region24: #{tpu_custom_call.1} parent=1 // pred_region
      %93 = dma.done [#allocation4], 256
    $region25: #{tpu_custom_call.1} parent=1 // pred_fallthru
      _
    %94 = vsyncpa [#allocation3], 1
    %95 = vsyncpa [#allocation4], 1

</llo_original>
